<compile_context>
chip_gen: v6e
topology: v6e:2x2x1
jax: 0.10.0
libtpu: 0.0.40
codegen_flags: <defaults>
</compile_context>

<pallas_src>
import jax
import jax.numpy as jnp
from jax import lax
from jax.experimental import pallas as pl
from jax.experimental.pallas import tpu as pltpu


# --------------------------------------------------------------------------
# planning helpers
# --------------------------------------------------------------------------
def _round_up(x, m):
    return ((x + m - 1) // m) * m


def _default_num_k_splits():
    """v7x has 2 TensorCores per chip: split the K reduction across them."""
    try:
        kind = jax.devices()[0].device_kind.lower()
    except Exception:
        return 1
    return 2 if ("v7" in kind or "tpu7" in kind) else 1


def _plan(N, K, tk, num_k_splits, feat_bytes):
    """Pick K tile, split count, padded K, grid steps and a VMEM limit."""
    # Lane-aligned tile, no larger than (padded) K; tk=512 default is a
    # multiple of both 256 (v6e/v7x MXU width) and 512 (v5e 4x128 MXU).
    tile = _round_up(max(128, min(tk, _round_up(K, 256))), 128)
    splits = num_k_splits if K > tile else 1
    k_pad = _round_up(K, tile * splits)
    steps = k_pad // (tile * splits)
    # Resident VMEM estimate: double-buffered feature tile + target + output
    # buffers + f32 accumulator + slack.  Raise the scoped limit above the
    # 16/32 MiB defaults (v5e/v6e) but clamp below v7x's 64 MiB physical VMEM.
    est = 2 * N * tile * feat_bytes + 4 * N * N * 4 + (2 << 20)
    vmem_limit = int(min(max(est, 32 << 20), 56 << 20))
    return tile, splits, k_pad, steps, vmem_limit


# --------------------------------------------------------------------------
# kernels
# --------------------------------------------------------------------------
def _make_loss_kernel(inv_norm):
    """Fused Gram + MSE; emits only the scalar loss (no N*N HBM writeback)."""

    def kernel(feat_ref, tgt_ref, loss_ref, acc_ref):
        k = pl.program_id(0)

        @pl.when(k == 0)
        def _():
            acc_ref[...] = jnp.zeros_like(acc_ref)

        x = feat_ref[...]                                   # (N, tile)
        # G_tile = x @ x.T expressed as a last-dim contraction of (x, x):
        # no explicit XLU transpose of the tile, MXU fed directly.
        acc_ref[...] += lax.dot_general(
            x, x, (((1,), (1,)), ((), ())),
            preferred_element_type=jnp.float32)

        @pl.when(k == pl.num_programs(0) - 1)
        def _():
            diff = acc_ref[...] * inv_norm - tgt_ref[...]
            loss_ref[0, 0] = jnp.mean(diff * diff)          # MSE reduction

    return kernel


def _make_gram_kernel(inv_norm):
    """Partial Gram over this split's slice of K; grid = (splits, steps)."""

    def kernel(feat_ref, g_ref, acc_ref):
        k = pl.program_id(1)

        @pl.when(k == 0)
        def _():
            acc_ref[...] = jnp.zeros_like(acc_ref)

        x = feat_ref[...]                                   # (N, tile)
        acc_ref[...] += lax.dot_general(
            x, x, (((1,), (1,)), ((), ())),
            preferred_element_type=jnp.float32)

        @pl.when(k == pl.num_programs(1) - 1)
        def _():
            g_ref[...] = (acc_ref[...] * inv_norm).astype(g_ref.dtype)

    return kernel


# --------------------------------------------------------------------------
# pallas_call wrappers
# --------------------------------------------------------------------------
def _partial_grams(feats, norm, *, tk, num_k_splits):
    """Partial Gram matrices, shape (splits, N, N) f32 (sum over axis 0 = G)."""
    N, K = feats.shape
    feat_bytes = jnp.dtype(feats.dtype).itemsize
    tile, splits, k_pad, steps, vmem_limit = _plan(
        N, K, tk, num_k_splits, feat_bytes)
    if k_pad != K:                    # zero-padding K is exact for a Gram
        feats = jnp.pad(feats, ((0, 0), (0, k_pad - K)))

    kernel = _make_gram_kernel(1.0 / float(norm))
    return pl.pallas_call(
        kernel,
        out_shape=jax.ShapeDtypeStruct((splits, N, N), jnp.float32),
        grid_spec=pltpu.PrefetchScalarGridSpec(
            num_scalar_prefetch=0,
            grid=(splits, steps),
            in_specs=[pl.BlockSpec((N, tile),
                                   lambda p, k: (0, p * steps + k))],
            out_specs=pl.BlockSpec((None, N, N), lambda p, k: (p, 0, 0)),
            scratch_shapes=[pltpu.VMEM((N, N), jnp.float32)]),
        compiler_params=pltpu.CompilerParams(
            dimension_semantics=("parallel", "arbitrary"),
            vmem_limit_bytes=vmem_limit),
    )(feats)


def style_loss(feats, target_gram, norm, *, tk=512, num_k_splits=1):
    """Scalar MSE between Gram(feats)/norm and target_gram. feats: (N, K)."""
    N, K = feats.shape
    feat_bytes = jnp.dtype(feats.dtype).itemsize
    tile, splits, k_pad, steps, vmem_limit = _plan(
        N, K, tk, num_k_splits, feat_bytes)

    if splits > 1:
        # Multi-TensorCore (v7x) path: partial Grams + tiny JAX epilogue.
        partial = _partial_grams(feats, norm, tk=tk, num_k_splits=num_k_splits)
        diff = partial.sum(axis=0) - target_gram.astype(jnp.float32)
        return jnp.mean(diff * diff)

    if k_pad != K:
        feats = jnp.pad(feats, ((0, 0), (0, k_pad - K)))

    kernel = _make_loss_kernel(1.0 / float(norm))
    loss = pl.pallas_call(
        kernel,
        out_shape=jax.ShapeDtypeStruct((1, 1), jnp.float32),
        grid_spec=pltpu.PrefetchScalarGridSpec(
            num_scalar_prefetch=0,
            grid=(steps,),
            in_specs=[pl.BlockSpec((N, tile), lambda k: (0, k)),
                      # target Gram: constant block index -> DMA'd once.
                      pl.BlockSpec((N, N), lambda k: (0, 0))],
            out_specs=pl.BlockSpec((1, 1), lambda k: (0, 0),
                                   memory_space=pltpu.SMEM),
            scratch_shapes=[pltpu.VMEM((N, N), jnp.float32)]),
        compiler_params=pltpu.CompilerParams(
            dimension_semantics=("arbitrary",),
            vmem_limit_bytes=vmem_limit),
    )(feats, target_gram.astype(jnp.float32))
    return loss[0, 0]


def gram_matrix(x, *, tk=512, feature_dtype=jnp.float32, num_k_splits=None):
    """Pallas equivalent of the PyTorch gram_matrix helper. x: (B, C, H, W)."""
    B, C, H, W = x.shape
    if num_k_splits is None:
        num_k_splits = _default_num_k_splits()
    feats = x.reshape(B * C, H * W).astype(feature_dtype)
    partial = _partial_grams(feats, B * C * H * W,
                             tk=tk, num_k_splits=num_k_splits)
    return partial[0] if partial.shape[0] == 1 else partial.sum(axis=0)


# --------------------------------------------------------------------------
# module
# --------------------------------------------------------------------------
class StyleLoss:
    """JAX/Pallas port of the PyTorch StyleLoss module (forward pass).

    feature_dtype=bfloat16 (default) halves HBM traffic on the mem-bound
    feature stream; accumulation stays f32.  Pass jnp.float32 for bit-level
    agreement with the PyTorch f32 reference.
    """

    def __init__(self, target_feature, *, tk=512,
                 feature_dtype=jnp.bfloat16, num_k_splits=None):
        self.tk = tk
        self.feature_dtype = feature_dtype
        self.num_k_splits = (_default_num_k_splits()
                             if num_k_splits is None else num_k_splits)
        # target Gram computed once at init (detached constant), kept in f32
        self.target = gram_matrix(
            target_feature, tk=tk, feature_dtype=feature_dtype,
            num_k_splits=self.num_k_splits).astype(jnp.float32)
        self.loss = None

    def __call__(self, x):
        B, C, H, W = x.shape
        feats = x.reshape(B * C, H * W).astype(self.feature_dtype)
        self.loss = style_loss(feats, self.target, B * C * H * W,
                               tk=self.tk, num_k_splits=self.num_k_splits)
        return x                       # module passes the input through


# --------------------------------------------------------------------------
# pure-JAX reference + test
# --------------------------------------------------------------------------
def _reference_gram(a):
    B, C, H, W = a.shape
    f = a.reshape(B * C, H * W).astype(jnp.float32)
    return (f @ f.T) / (B * C * H * W)


def _reference_loss(x, target_feature):
    d = _reference_gram(x) - _reference_gram(target_feature)
    return jnp.mean(d * d)


if __name__ == "__main__":
    key = jax.random.PRNGKey(0)
    k1, k2 = jax.random.split(key)

    B, C, H, W = 2, 4, 16, 16                     # small NCHW shapes
    target_feature = jax.random.normal(k1, (B, C, H, W), jnp.float32)
    x = jax.random.normal(k2, (B, C, H, W), jnp.float32)

    ref_loss = _reference_loss(x, target_feature)
    ref_gram = _reference_gram(x)

    # --- strict check: f32 feature path matches the PyTorch f32 reference ---
    mod_f32 = StyleLoss(target_feature, feature_dtype=jnp.float32)
    out = jax.block_until_ready(mod_f32(x))
    loss_f32 = jax.block_until_ready(mod_f32.loss)
    assert out.shape == x.shape and jnp.allclose(out, x)
    assert jnp.allclose(loss_f32, ref_loss, rtol=1e-5, atol=1e-6), (loss_f32,
                                                                    ref_loss)

    # --- gram_matrix helper check ------------------------------------------
    g = jax.block_until_ready(gram_matrix(x))
    assert jnp.allclose(g, ref_gram, rtol=1e-5, atol=1e-6)

    # --- fast path: bf16 feature streaming, f32 accumulation ----------------
    mod_bf16 = StyleLoss(target_feature)          # default feature_dtype=bf16
    _ = mod_bf16(x)
    loss_bf16 = jax.block_until_ready(mod_bf16.loss)
    assert jnp.allclose(loss_bf16, ref_loss, rtol=1e-1, atol=1e-5), (loss_bf16,
                                                                     ref_loss)

    # --- exercise the K-split ("parallel") path used for v7x on any chip ----
    mod_split = StyleLoss(target_feature, feature_dtype=jnp.float32,
                          tk=128, num_k_splits=2)
    _ = mod_split(x)
    loss_split = jax.block_until_ready(mod_split.loss)
    assert jnp.allclose(loss_split, ref_loss, rtol=1e-5, atol=1e-6), (
        loss_split, ref_loss)

    print("KERNEL_OK")
</pallas_src>

<mosaic_0001>
module attributes {stable_mosaic.version = 11 : i64} {
  func.func @kernel(%arg0: i32, %arg1: i32, %arg2: memref<8x256xf32, #tpu.memory_space<vmem>>, %arg3: memref<1x8x8xf32, #tpu.memory_space<vmem>>, %arg4: memref<8x8xf32, #tpu.memory_space<vmem>>) attributes {dimension_semantics = [#tpu.dimension_semantics<parallel>, #tpu.dimension_semantics<arbitrary>], iteration_bounds = array<i64: 1, 1>, scalar_prefetch = 0 : i64, scratch_operands = 1 : i64, tpu.core_type = #tpu.core_type<tc>, window_params = [{transform_indices = @transform_0, window_bounds = array<i64: 8, 256>}, {transform_indices = @transform_1, window_bounds = array<i64: 1, 8, 8>}]} {
    %c0_i32 = arith.constant 0 : i32
    %0 = arith.cmpi eq, %arg1, %c0_i32 : i32
    %1 = arith.extui %0 : i1 to i32
    %c0_i32_0 = arith.constant 0 : i32
    %2 = arith.cmpi ne, %1, %c0_i32_0 : i32
    scf.if %2 {
      %cst_8 = arith.constant 0.000000e+00 : f32
      %11 = vector.broadcast %cst_8 : f32 to vector<8x8xf32>
      %c0_9 = arith.constant 0 : index
      %c0_10 = arith.constant 0 : index
      %12 = vector.load %arg4[%c0_9, %c0_10] : memref<8x8xf32, #tpu.memory_space<vmem>>, vector<8x8xf32>
      tpu.vector_store %arg4[%c0_9, %c0_10], %11 {strides = array<i32>} : memref<8x8xf32, #tpu.memory_space<vmem>>, vector<8x8xf32>,
    } else {
    }
    %c0 = arith.constant 0 : index
    %c0_1 = arith.constant 0 : index
    %3 = vector.load %arg2[%c0, %c0_1] : memref<8x256xf32, #tpu.memory_space<vmem>>, vector<8x256xf32>
    %c0_2 = arith.constant 0 : index
    %c0_3 = arith.constant 0 : index
    %4 = vector.load %arg4[%c0_2, %c0_3] : memref<8x8xf32, #tpu.memory_space<vmem>>, vector<8x8xf32>
    %cst = arith.constant dense<0.000000e+00> : vector<8x8xf32>
    %5 = tpu.matmul %3, %3, %cst {dimension_numbers = #tpu.dot_dimension_numbers<[1], [1], [0], [0], [0, 0, 1, 0], [], []>} : vector<8x256xf32>, vector<8x256xf32>, vector<8x8xf32> -> vector<8x8xf32>
    %6 = arith.addf %4, %5 : vector<8x8xf32>
    %c0_4 = arith.constant 0 : index
    %c0_5 = arith.constant 0 : index
    %7 = vector.load %arg4[%c0_4, %c0_5] : memref<8x8xf32, #tpu.memory_space<vmem>>, vector<8x8xf32>
    tpu.vector_store %arg4[%c0_4, %c0_5], %6 {strides = array<i32>} : memref<8x8xf32, #tpu.memory_space<vmem>>, vector<8x8xf32>,
    %c0_i32_6 = arith.constant 0 : i32
    %8 = arith.cmpi eq, %arg1, %c0_i32_6 : i32
    %9 = arith.extui %8 : i1 to i32
    %c0_i32_7 = arith.constant 0 : i32
    %10 = arith.cmpi ne, %9, %c0_i32_7 : i32
    scf.if %10 {
      %c0_8 = arith.constant 0 : index
      %c0_9 = arith.constant 0 : index
      %11 = vector.load %arg4[%c0_8, %c0_9] : memref<8x8xf32, #tpu.memory_space<vmem>>, vector<8x8xf32>
      %cst_10 = arith.constant 4.8828125E-4 : f32
      %12 = vector.broadcast %cst_10 : f32 to vector<8x8xf32>
      %13 = arith.mulf %11, %12 : vector<8x8xf32>
      %c0_11 = arith.constant 0 : index
      %c0_12 = arith.constant 0 : index
      %c0_13 = arith.constant 0 : index
      %14 = vector.load %arg3[%c0_11, %c0_12, %c0_13] : memref<1x8x8xf32, #tpu.memory_space<vmem>>, vector<1x8x8xf32>
      %15 = vector.shape_cast %14 : vector<1x8x8xf32> to vector<8x8xf32>
      %16 = vector.shape_cast %13 : vector<8x8xf32> to vector<1x8x8xf32>
      tpu.vector_store %arg3[%c0_11, %c0_12, %c0_13], %16 {strides = array<i32>} : memref<1x8x8xf32, #tpu.memory_space<vmem>>, vector<1x8x8xf32>,
    } else {
    }
    return
  }
  func.func @transform_0(%arg0: i32, %arg1: i32) -> (i32, i32) {
    %c1_i32 = arith.constant 1 : i32
    %0 = arith.muli %arg0, %c1_i32 : i32
    %1 = arith.addi %0, %arg1 : i32
    %c0_i32 = arith.constant 0 : i32
    %c0_i32_0 = arith.constant 0 : i32
    return %c0_i32, %1 : i32, i32
  }
  func.func @transform_1(%arg0: i32, %arg1: i32) -> (i32, i32, i32) {
    %c0_i32 = arith.constant 0 : i32
    %c0_i32_0 = arith.constant 0 : i32
    %c0_i32_1 = arith.constant 0 : i32
    return %arg0, %c0_i32, %c0_i32_0 : i32, i32, i32
  }
}

</mosaic_0001>

<llo_original>
// kernel: tpu_custom_call.1
$region0: #{tpu_custom_call.1}
  #allocation0 [shape = 'u32[]', space=smem, size = 0x4, offset = 0x4, fixed_abs, tag = 'smem constant byte address 0x4 - core index']
  #allocation1 [shape = 'u32[144,128]{1,0:T(1,128)}', space=vmem, size = 0x12000, scoped, tag = 'internal scratch']
  #allocation2 [shape = 'f32[8,8]{1,0:T(8,128)}', space=vmem, size = 0x1000, scoped, tag = 'scratch operand']
  %s0 = inlined_call_operand.hbm [shape: f32[8,256], index: 0, kind: input, shape index: {}]
  %s1 = inlined_call_operand.hbm [shape: f32[1,8,8], index: 1, kind: output, shape index: {}]
  %s2 = sld [smem:[#allocation0]]
  $region26: #{tpu_custom_call.1} parent=0
    _
  %s4 = ssub.s32 1, %s2
  %s5 = scalar_select 0, %s4, %s2
  $region1: #{tpu_custom_call.1} parent=0
    #allocation3 [shape = 'u8[8192]{0}', space=vmem, size = 0x2000, scoped, tag = 'input window, operand 0, single buffered']
    #allocation4 [shape = 's32[1]{0}', space=sflag, size = 0x4, scoped, tag = 'scoped memory for tpu_custom_call.1']
    #allocation5 [shape = 's32[1]{0}', space=sflag, size = 0x4, scoped, tag = 'scoped memory for tpu_custom_call.1']
    #allocation6 [shape = 'u8[4096]{0}', space=vmem, size = 0x1000, scoped, tag = 'output window, operand 0, single buffered']
    %6 = vsyncpa [#allocation4], 0
    %7 = vsyncpa [#allocation5], 0
    // Predicated region
    $region2: #{tpu_custom_call.1} parent=1 // pred_check
      _
    $region3: #{tpu_custom_call.1} parent=1 // pred_check_branch
      %9 = sbr.rel (0) target = $region5
    $region4: #{tpu_custom_call.1} parent=1 // pred_region
      %s10 = sadd.s32 0, 0
      %s11 = smul.u32 2, %s10
      %s13 = ssub.s32 256, 256
      %14 = vsyncadd [#allocation4], %s13
      %s15 = smul.addr %s11, 128
      %s16 = scalar_lea.hbm %s0, %s15
      %s18 = sshll.u32 [#allocation3], 4
      %s19 = int_to_ptr.vmem [resolvable:$true] %s18
      %21 = dma.hbm_to_vmem [thread:$0]  %s16, 256, %s19, [#allocation4]
    $region5: #{tpu_custom_call.1} parent=1 // pred_fallthru
      _
    // Predicated region
    $region6: #{tpu_custom_call.1} parent=1 // pred_check
      _
    $region7: #{tpu_custom_call.1} parent=1 // pred_check_branch
      %23 = sbr.rel (0) target = $region9
    $region8: #{tpu_custom_call.1} parent=1 // pred_region
      %24 = dma.done [#allocation4], 256
    $region9: #{tpu_custom_call.1} parent=1 // pred_fallthru
      _
    %s25 = sadd.s32 0, 0
    %s26 = smul.u32 2, %s25
    %p27 = scmp.eq.s32.totalorder 0, 0
    // Predicated region
    $region10: #{tpu_custom_call.1} parent=1 // pred_check
      %p28 = pneg %p27
    $region11: #{tpu_custom_call.1} parent=1 // pred_check_branch
      %30 = sbr.rel (%p28) target = $region13
    $region12: #{tpu_custom_call.1} parent=1 // pred_region
      %vm31 = vcmask 64512
      %32 = vst.msk [vmem:[#allocation2] sm:$0xff] %vm31, 0.0
    $region13: #{tpu_custom_call.1} parent=1 // pred_fallthru
      _
    %v33 = vld [vmem:[#allocation3] sm:$0xff]
    %v34 = vld [vmem:[#allocation3 + $0x8] sm:$0xff]
    %v35 = vld [vmem:[#allocation2] sm:$0xff]
    %36 = vmatprep.subr.mxu0 0.0
    %37 = vmatpush1.xpose.msra.mxu0 0.0
    %38 = vmatprep.subr.mxu0 0.0
    %39 = vmatpush1.xpose.msra.mxu0 0.0
    %40 = vmatprep.subr.mxu0 0.0
    %41 = vmatpush1.xpose.msra.mxu0 0.0
    %42 = vmatprep.subr.mxu0 0.0
    %43 = vmatpush1.xpose.msra.mxu0 0.0
    %44 = vmatprep.subr.mxu0 0.0
    %45 = vmatpush1.xpose.msra.mxu0 0.0
    %46 = vmatprep.subr.mxu0 0.0
    %47 = vmatpush1.xpose.msra.mxu0 0.0
    %48 = vmatprep.subr.mxu0 0.0
    %49 = vmatpush1.xpose.msra.mxu0 0.0
    %50 = vmatprep.subr.mxu0 0.0
    %51 = vmatpush1.xpose.msra.mxu0 0.0
    %52 = vmatprep.subr.mxu0 0.0
    %53 = vmatpush1.xpose.msra.mxu0 0.0
    %54 = vmatprep.subr.mxu0 0.0
    %55 = vmatpush1.xpose.msra.mxu0 0.0
    %56 = vmatprep.subr.mxu0 0.0
    %57 = vmatpush1.xpose.msra.mxu0 0.0
    %58 = vmatprep.subr.mxu0 0.0
    %59 = vmatpush1.xpose.msra.mxu0 0.0
    %60 = vmatprep.subr.mxu0 0.0
    %61 = vmatpush1.xpose.msra.mxu0 0.0
    %62 = vmatprep.subr.mxu0 0.0
    %63 = vmatpush1.xpose.msra.mxu0 0.0
    %64 = vmatprep.subr.mxu0 0.0
    %65 = vmatpush1.xpose.msra.mxu0 0.0
    %66 = vmatprep.subr.mxu0 %v34
    %67 = vmatpush1.xpose.msra.mxu0 %v33
    %68 = vmatprep.subr.mxu0 0.0
    %69 = vmatpush2.xpose.msra.mxu0 0.0
    %70 = vmatprep.subr.mxu0 0.0
    %71 = vmatpush2.xpose.msra.mxu0 0.0
    %72 = vmatprep.subr.mxu0 0.0
    %73 = vmatpush2.xpose.msra.mxu0 0.0
    %74 = vmatprep.subr.mxu0 0.0
    %75 = vmatpush2.xpose.msra.mxu0 0.0
    %76 = vmatprep.subr.mxu0 0.0
    %77 = vmatpush2.xpose.msra.mxu0 0.0
    %78 = vmatprep.subr.mxu0 0.0
    %79 = vmatpush2.xpose.msra.mxu0 0.0
    %80 = vmatprep.subr.mxu0 0.0
    %81 = vmatpush2.xpose.msra.mxu0 0.0
    %82 = vmatprep.subr.mxu0 0.0
    %83 = vmatpush2.xpose.msra.mxu0 0.0
    %84 = vmatprep.subr.mxu0 0.0
    %85 = vmatpush2.xpose.msra.mxu0 0.0
    %86 = vmatprep.subr.mxu0 0.0
    %87 = vmatpush2.xpose.msra.mxu0 0.0
    %88 = vmatprep.subr.mxu0 0.0
    %89 = vmatpush2.xpose.msra.mxu0 0.0
    %90 = vmatprep.subr.mxu0 0.0
    %91 = vmatpush2.xpose.msra.mxu0 0.0
    %92 = vmatprep.subr.mxu0 0.0
    %93 = vmatpush2.xpose.msra.mxu0 0.0
    %94 = vmatprep.subr.mxu0 0.0
    %95 = vmatpush2.xpose.msra.mxu0 0.0
    %96 = vmatprep.subr.mxu0 0.0
    %97 = vmatpush2.xpose.msra.mxu0 0.0
    %98 = vmatprep.subr.mxu0 0.0
    %99 = vmatpush2.xpose.msra.mxu0 0.0
    %100 = vmatprep.mubr.f32.mxu0 %v34
    %101 = vmatmul.mubr.f32.gmra.mxu0 %v33
    %v102 = vpop.f32.mrf.mxu0
    %v103 = vadd.f32 0.0, %v102
    %v104 = vpop.f32.mrf.mxu0
    %105 = vdwg.mxu0
    %v106 = vadd.f32 %v35, %v103
    %vm107 = vcmask 64512
    %108 = vst.msk [vmem:[#allocation2] sm:$0xff] %vm107, %v106
    // Predicated region
    $region14: #{tpu_custom_call.1} parent=1 // pred_check
      %p109 = pneg %p27
    $region15: #{tpu_custom_call.1} parent=1 // pred_check_branch
      %111 = sbr.rel (%p109) target = $region17
    $region16: #{tpu_custom_call.1} parent=1 // pred_region
      %v112 = vld [vmem:[#allocation2] sm:$0xff]
      %v113 = vmul.f32 %v112, 0.00048828125
      %114 = vst.msk [vmem:[#allocation6] sm:$0xff] %vm107, %v113
    $region17: #{tpu_custom_call.1} parent=1 // pred_fallthru
      _
    // Predicated region
    $region18: #{tpu_custom_call.1} parent=1 // pred_check
      _
    $region19: #{tpu_custom_call.1} parent=1 // pred_check_branch
      %116 = sbr.rel (0) target = $region21
    $region20: #{tpu_custom_call.1} parent=1 // pred_region
      %s118 = ssub.s32 128, 128
      %119 = vsyncadd [#allocation5], %s118
      %s121 = sshll.u32 [#allocation6], 4
      %s122 = int_to_ptr.vmem [resolvable:$true] %s121
      %124 = dma.vmem_to_hbm [thread:$0]  %s122, 128, %s1, [#allocation5]
    $region21: #{tpu_custom_call.1} parent=1 // pred_fallthru
      _
    // Predicated region
    $region22: #{tpu_custom_call.1} parent=1 // pred_check
      _
    $region23: #{tpu_custom_call.1} parent=1 // pred_check_branch
      %126 = sbr.rel (0) target = $region25
    $region24: #{tpu_custom_call.1} parent=1 // pred_region
      %127 = dma.done [#allocation5], 128
    $region25: #{tpu_custom_call.1} parent=1 // pred_fallthru
      _
    %128 = vsyncpa [#allocation4], 1
    %129 = vsyncpa [#allocation5], 1

</llo_original>
